<compile_context>
chip_gen: v7x
topology: tpu7x:2x2x1
jax: 0.10.0
libtpu: 0.0.40
codegen_flags: <defaults>
</compile_context>

<pallas_src>
import functools

import jax
import jax.numpy as jnp
from jax.experimental import pallas as pl
from jax.experimental.pallas import tpu as pltpu


def _round_up(x, m):
    return ((x + m - 1) // m) * m


def _chip_vmem_and_cores():
    """Returns (vmem_capacity_bytes, dual_tensorcore_chip)."""
    try:
        cap = int(pltpu.get_tpu_info().vmem_capacity_bytes)
        # v7x-class chips have 64 MiB VMEM per TC and 2 TCs per chip.
        return cap, cap <= (64 << 20)
    except Exception:
        # Unknown chip: size conservatively for 64 MiB, assume a single TC.
        return 64 << 20, False


def _broadcast_add_kernel(style_ref, cls_flat_ref, out_ref, *, n_class, d):
    # style_ref:    (TS, D)      tile of style words
    # cls_flat_ref: (1, NC*D)    all class words, lane-flattened, VMEM-resident
    # out_ref:      (TS, NC*D)   lane-dense output tile
    style = style_ref[...]                       # load once, reuse per class
    for c in range(n_class):                     # static slices -> unmasked vst
        lo = c * d
        out_ref[:, lo:lo + d] = style + cls_flat_ref[:, lo:lo + d]


def _build_call(kernel, n_style, flat_d, d, tile, grid, dtype, semantics,
                class_buffered, vmem_limit, bytes_accessed, flops):
    if class_buffered:
        cls_spec = pl.BlockSpec((1, flat_d), lambda i: (0, 0),
                                pipeline_mode=pl.Buffered(1))
    else:
        cls_spec = pl.BlockSpec((1, flat_d), lambda i: (0, 0))
    return pl.pallas_call(
        kernel,
        out_shape=jax.ShapeDtypeStruct((n_style, flat_d), dtype),
        grid_spec=pltpu.PrefetchScalarGridSpec(
            num_scalar_prefetch=0,
            grid=grid,
            in_specs=[
                pl.BlockSpec((tile, d), lambda i: (i, 0)),
                cls_spec,  # constant index_map -> stays resident, no re-copy
            ],
            out_specs=pl.BlockSpec((tile, flat_d), lambda i: (i, 0)),
        ),
        compiler_params=pltpu.CompilerParams(
            dimension_semantics=(semantics,),
            vmem_limit_bytes=vmem_limit,
        ),
        cost_estimate=pl.CostEstimate(
            flops=flops, transcendentals=0, bytes_accessed=bytes_accessed),
    )


def word_model_forward(style_words, class_words, *,
                       use_pallas=None,
                       max_tile_style=2048,
                       small_output_bytes=2 << 20):
    """Returns [style_words, style_words[:,None,:] + class_words[None,:,:]]."""
    n_style, d = style_words.shape
    n_class, d2 = class_words.shape
    assert d == d2
    dtype = style_words.dtype
    itemsize = jnp.dtype(dtype).itemsize
    flat_d = n_class * d
    out_bytes = n_style * flat_d * itemsize

    if use_pallas is None:
        use_pallas = out_bytes >= small_output_bytes
    if not use_pallas:
        # Launch/step-overhead-bound regime: XLA's fused broadcast add wins.
        return [style_words, style_words[:, None, :] + class_words[None, :, :]]

    # ---- chip-aware sizing -------------------------------------------------
    vmem_cap, dual_tc = _chip_vmem_and_cores()
    budget = min(max(16 << 20, vmem_cap - (16 << 20)), 100 << 20)

    # dtype-aware sublane multiple: 8 rows fp32, 16 bf16, 32 int8/fp8.
    sub = 8 * max(1, 4 // max(1, itemsize))

    if dual_tc and n_style > sub:
        # Two balanced tiles so both TensorCores share the store work.
        tile = _round_up(pl.cdiv(n_style, 2), sub)
    else:
        # Single-TC chip: one full block, no per-step overhead.
        tile = _round_up(n_style, sub)
    tile = min(tile, _round_up(min(max_tile_style, n_style), sub))

    def vmem_bytes(t):
        # double-buffered style tile + out tile, resident class block.
        return itemsize * (2 * t * d + 2 * flat_d + 2 * t * flat_d)

    while tile > sub and vmem_bytes(tile) > budget:
        tile = _round_up(max(tile // 2, sub), sub)

    grid = (pl.cdiv(n_style, tile),)

    vmem_limit = int(max(32 << 20,
                         min(vmem_bytes(tile) + (8 << 20), vmem_cap - (8 << 20))))
    bytes_accessed = itemsize * (n_style * d + n_class * d + n_style * flat_d)
    flops = n_style * n_class * d

    # Free row-major reshape: (NC, D) -> (1, NC*D); matches flat output layout.
    cls_flat = class_words.reshape(1, flat_d)
    kernel = functools.partial(_broadcast_add_kernel, n_class=n_class, d=d)

    core_parallel = getattr(pltpu, "CORE_PARALLEL", None)
    tuned_sem = (core_parallel
                 if (dual_tc and grid[0] >= 2 and core_parallel is not None)
                 else "parallel")

    try:
        flat_out = _build_call(kernel, n_style, flat_d, d, tile, grid, dtype,
                               tuned_sem, True, vmem_limit, bytes_accessed,
                               flops)(style_words, cls_flat)
    except Exception:
        # Safe fallback: plain "parallel", default-buffered class block.
        flat_out = _build_call(kernel, n_style, flat_d, d, tile, grid, dtype,
                               "parallel", False, vmem_limit, bytes_accessed,
                               flops)(style_words, cls_flat)

    # Free reshape back to the module's 3-D layout (identical row-major bytes).
    return [style_words, flat_out.reshape(n_style, n_class, d)]


if __name__ == "__main__":
    key = jax.random.PRNGKey(0)
    k1, k2, k3, k4 = jax.random.split(key, 4)

    # Case 1: small shapes consistent with the module (scaled down),
    # forced through the Pallas kernel.
    n_style, d, n_class = 16, 128, 4
    style_words = jax.random.normal(k1, (n_style, d), dtype=jnp.float32) * 0.02
    class_words = jax.random.normal(k2, (n_class, d), dtype=jnp.float32)
    ref = style_words[:, None, :] + class_words[None, :, :]

    outs = jax.block_until_ready(
        word_model_forward(style_words, class_words, use_pallas=True))
    assert outs[0].shape == (n_style, d) and jnp.allclose(outs[0], style_words)
    assert outs[1].shape == (n_style, n_class, d)
    assert jnp.allclose(outs[1], ref, atol=1e-6)

    # Case 1b: auto path (tiny output -> fused plain-JAX fast path).
    outs_auto = jax.block_until_ready(word_model_forward(style_words, class_words))
    assert jnp.allclose(outs_auto[1], ref, atol=1e-6)

    # Case 2: module-default-like shapes (n_style_words=80, style_word_dim=512,
    # 7 classes), forced through the kernel.
    n_style, d, n_class = 80, 512, 7
    style_words = jax.random.normal(k3, (n_style, d), dtype=jnp.float32) * 0.02
    class_words = jax.random.normal(k4, (n_class, d), dtype=jnp.float32)
    ref = style_words[:, None, :] + class_words[None, :, :]

    outs = jax.block_until_ready(
        word_model_forward(style_words, class_words, use_pallas=True))
    assert outs[1].shape == (n_style, n_class, d)
    assert jnp.allclose(outs[1], ref, atol=1e-6)

    print("KERNEL_OK")
</pallas_src>

<mosaic_0001>
module attributes {stable_mosaic.version = 11 : i64} {
  func.func @_broadcast_add_kernel(%arg0: i32, %arg1: memref<16x128xf32, #tpu.memory_space<vmem>>, %arg2: memref<1x512xf32, #tpu.memory_space<vmem>>, %arg3: memref<16x512xf32, #tpu.memory_space<vmem>>) attributes {dimension_semantics = [#tpu.dimension_semantics<parallel>], iteration_bounds = array<i64: 1>, scalar_prefetch = 0 : i64, scratch_operands = 0 : i64, tpu.core_type = #tpu.core_type<tc>, window_params = [{transform_indices = @transform_0, window_bounds = array<i64: 16, 128>}, {pipeline_mode = #tpu.pipeline_mode<synchronous>, transform_indices = @transform_1, window_bounds = array<i64: 1, 512>}, {transform_indices = @transform_2, window_bounds = array<i64: 16, 512>}]} {
    %c0 = arith.constant 0 : index
    %c0_0 = arith.constant 0 : index
    %0 = vector.load %arg1[%c0, %c0_0] : memref<16x128xf32, #tpu.memory_space<vmem>>, vector<16x128xf32>
    %c0_1 = arith.constant 0 : index
    %c0_2 = arith.constant 0 : index
    %1 = vector.load %arg2[%c0_1, %c0_2] : memref<1x512xf32, #tpu.memory_space<vmem>>, vector<1x128xf32>
    %2 = vector.broadcast %1 : vector<1x128xf32> to vector<16x128xf32>
    %3 = arith.addf %0, %2 : vector<16x128xf32>
    %c0_3 = arith.constant 0 : index
    %c0_4 = arith.constant 0 : index
    %4 = vector.load %arg3[%c0_3, %c0_4] : memref<16x512xf32, #tpu.memory_space<vmem>>, vector<16x128xf32>
    tpu.vector_store %arg3[%c0_3, %c0_4], %3 {strides = array<i32>} : memref<16x512xf32, #tpu.memory_space<vmem>>, vector<16x128xf32>,
    %c0_5 = arith.constant 0 : index
    %c128 = arith.constant 128 : index
    %5 = vector.load %arg2[%c0_5, %c128] : memref<1x512xf32, #tpu.memory_space<vmem>>, vector<1x128xf32>
    %6 = vector.broadcast %5 : vector<1x128xf32> to vector<16x128xf32>
    %7 = arith.addf %0, %6 : vector<16x128xf32>
    %c0_6 = arith.constant 0 : index
    %c128_7 = arith.constant 128 : index
    %8 = vector.load %arg3[%c0_6, %c128_7] : memref<16x512xf32, #tpu.memory_space<vmem>>, vector<16x128xf32>
    tpu.vector_store %arg3[%c0_6, %c128_7], %7 {strides = array<i32>} : memref<16x512xf32, #tpu.memory_space<vmem>>, vector<16x128xf32>,
    %c0_8 = arith.constant 0 : index
    %c256 = arith.constant 256 : index
    %9 = vector.load %arg2[%c0_8, %c256] : memref<1x512xf32, #tpu.memory_space<vmem>>, vector<1x128xf32>
    %10 = vector.broadcast %9 : vector<1x128xf32> to vector<16x128xf32>
    %11 = arith.addf %0, %10 : vector<16x128xf32>
    %c0_9 = arith.constant 0 : index
    %c256_10 = arith.constant 256 : index
    %12 = vector.load %arg3[%c0_9, %c256_10] : memref<16x512xf32, #tpu.memory_space<vmem>>, vector<16x128xf32>
    tpu.vector_store %arg3[%c0_9, %c256_10], %11 {strides = array<i32>} : memref<16x512xf32, #tpu.memory_space<vmem>>, vector<16x128xf32>,
    %c0_11 = arith.constant 0 : index
    %c384 = arith.constant 384 : index
    %13 = vector.load %arg2[%c0_11, %c384] : memref<1x512xf32, #tpu.memory_space<vmem>>, vector<1x128xf32>
    %14 = vector.broadcast %13 : vector<1x128xf32> to vector<16x128xf32>
    %15 = arith.addf %0, %14 : vector<16x128xf32>
    %c0_12 = arith.constant 0 : index
    %c384_13 = arith.constant 384 : index
    %16 = vector.load %arg3[%c0_12, %c384_13] : memref<16x512xf32, #tpu.memory_space<vmem>>, vector<16x128xf32>
    tpu.vector_store %arg3[%c0_12, %c384_13], %15 {strides = array<i32>} : memref<16x512xf32, #tpu.memory_space<vmem>>, vector<16x128xf32>,
    return
  }
  func.func @transform_0(%arg0: i32) -> (i32, i32) {
    %c0_i32 = arith.constant 0 : i32
    %c0_i32_0 = arith.constant 0 : i32
    return %arg0, %c0_i32 : i32, i32
  }
  func.func @transform_1(%arg0: i32) -> (i32, i32) {
    %c0_i32 = arith.constant 0 : i32
    %c0_i32_0 = arith.constant 0 : i32
    %c0_i32_1 = arith.constant 0 : i32
    return %c0_i32, %c0_i32_0 : i32, i32
  }
  func.func @transform_2(%arg0: i32) -> (i32, i32) {
    %c0_i32 = arith.constant 0 : i32
    %c0_i32_0 = arith.constant 0 : i32
    return %arg0, %c0_i32 : i32, i32
  }
}

module attributes {stable_mosaic.version = 11 : i64} {
  func.func @_broadcast_add_kernel(%arg0: i32, %arg1: memref<16x128xf32, #tpu.memory_space<vmem>>, %arg2: memref<1x512xf32, #tpu.memory_space<vmem>>, %arg3: memref<16x512xf32, #tpu.memory_space<vmem>>) attributes {dimension_semantics = [#tpu.dimension_semantics<parallel>], iteration_bounds = array<i64: 1>, scalar_prefetch = 0 : i64, scratch_operands = 0 : i64, tpu.core_type = #tpu.core_type<tc>, window_params = [{transform_indices = @transform_0, window_bounds = array<i64: 16, 128>}, {pipeline_mode = #tpu.pipeline_mode<synchronous>, transform_indices = @transform_1, window_bounds = array<i64: 1, 512>}, {transform_indices = @transform_2, window_bounds = array<i64: 16, 512>}]} {
    %c0 = arith.constant 0 : index
    %c0_0 = arith.constant 0 : index
    %0 = vector.load %arg1[%c0, %c0_0] : memref<16x128xf32, #tpu.memory_space<vmem>>, vector<16x128xf32>
    %c0_1 = arith.constant 0 : index
    %c0_2 = arith.constant 0 : index
    %1 = vector.load %arg2[%c0_1, %c0_2] : memref<1x512xf32, #tpu.memory_space<vmem>>, vector<1x128xf32>
    %2 = vector.broadcast %1 : vector<1x128xf32> to vector<16x128xf32>
    %3 = arith.addf %0, %2 : vector<16x128xf32>
    %c0_3 = arith.constant 0 : index
    %c0_4 = arith.constant 0 : index
    %4 = vector.load %arg3[%c0_3, %c0_4] : memref<16x512xf32, #tpu.memory_space<vmem>>, vector<16x128xf32>
    tpu.vector_store %arg3[%c0_3, %c0_4], %3 {strides = array<i32>} : memref<16x512xf32, #tpu.memory_space<vmem>>, vector<16x128xf32>,
    %c0_5 = arith.constant 0 : index
    %c128 = arith.constant 128 : index
    %5 = vector.load %arg2[%c0_5, %c128] : memref<1x512xf32, #tpu.memory_space<vmem>>, vector<1x128xf32>
    %6 = vector.broadcast %5 : vector<1x128xf32> to vector<16x128xf32>
    %7 = arith.addf %0, %6 : vector<16x128xf32>
    %c0_6 = arith.constant 0 : index
    %c128_7 = arith.constant 128 : index
    %8 = vector.load %arg3[%c0_6, %c128_7] : memref<16x512xf32, #tpu.memory_space<vmem>>, vector<16x128xf32>
    tpu.vector_store %arg3[%c0_6, %c128_7], %7 {strides = array<i32>} : memref<16x512xf32, #tpu.memory_space<vmem>>, vector<16x128xf32>,
    %c0_8 = arith.constant 0 : index
    %c256 = arith.constant 256 : index
    %9 = vector.load %arg2[%c0_8, %c256] : memref<1x512xf32, #tpu.memory_space<vmem>>, vector<1x128xf32>
    %10 = vector.broadcast %9 : vector<1x128xf32> to vector<16x128xf32>
    %11 = arith.addf %0, %10 : vector<16x128xf32>
    %c0_9 = arith.constant 0 : index
    %c256_10 = arith.constant 256 : index
    %12 = vector.load %arg3[%c0_9, %c256_10] : memref<16x512xf32, #tpu.memory_space<vmem>>, vector<16x128xf32>
    tpu.vector_store %arg3[%c0_9, %c256_10], %11 {strides = array<i32>} : memref<16x512xf32, #tpu.memory_space<vmem>>, vector<16x128xf32>,
    %c0_11 = arith.constant 0 : index
    %c384 = arith.constant 384 : index
    %13 = vector.load %arg2[%c0_11, %c384] : memref<1x512xf32, #tpu.memory_space<vmem>>, vector<1x128xf32>
    %14 = vector.broadcast %13 : vector<1x128xf32> to vector<16x128xf32>
    %15 = arith.addf %0, %14 : vector<16x128xf32>
    %c0_12 = arith.constant 0 : index
    %c384_13 = arith.constant 384 : index
    %16 = vector.load %arg3[%c0_12, %c384_13] : memref<16x512xf32, #tpu.memory_space<vmem>>, vector<16x128xf32>
    tpu.vector_store %arg3[%c0_12, %c384_13], %15 {strides = array<i32>} : memref<16x512xf32, #tpu.memory_space<vmem>>, vector<16x128xf32>,
    return
  }
  func.func @transform_0(%arg0: i32) -> (i32, i32) {
    %c0_i32 = arith.constant 0 : i32
    %c0_i32_0 = arith.constant 0 : i32
    return %arg0, %c0_i32 : i32, i32
  }
  func.func @transform_1(%arg0: i32) -> (i32, i32) {
    %c0_i32 = arith.constant 0 : i32
    %c0_i32_0 = arith.constant 0 : i32
    %c0_i32_1 = arith.constant 0 : i32
    return %c0_i32, %c0_i32_0 : i32, i32
  }
  func.func @transform_2(%arg0: i32) -> (i32, i32) {
    %c0_i32 = arith.constant 0 : i32
    %c0_i32_0 = arith.constant 0 : i32
    return %arg0, %c0_i32 : i32, i32
  }
}

</mosaic_0001>

<llo_original>
// kernel: tpu_custom_call.1
$region0: #{tpu_custom_call.1}
  #allocation0 [shape = 'u32[]', space=smem, size = 0x4, offset = 0x4, fixed_abs, tag = 'smem constant byte address 0x4 - core index']
  #allocation1 [shape = 'u32[144,128]{1,0:T(1,128)}', space=vmem, size = 0x12000, scoped, tag = 'internal scratch']
  %s0 = inlined_call_operand.hbm [shape: f32[16,128], index: 0, kind: input, shape index: {}]
  %s1 = inlined_call_operand.hbm [shape: f32[1,512], index: 1, kind: input, shape index: {}]
  %s2 = inlined_call_operand.hbm [shape: f32[16,512], index: 2, kind: output, shape index: {}]
  %s3 = sld [smem:[#allocation0]]
  $region26: #{tpu_custom_call.1} parent=0
    _
  %s5 = ssub.s32 1, %s3
  %s6 = scalar_select 0, %s5, %s3
  $region1: #{tpu_custom_call.1} parent=0
    #allocation2 [shape = 'u8[8192]{0}', space=vmem, size = 0x2000, scoped, tag = 'input window, operand 0, single buffered']
    #allocation3 [shape = 's32[1]{0}', space=sflag, size = 0x4, scoped, tag = 'scoped memory for tpu_custom_call.1']
    #allocation4 [shape = 's32[1]{0}', space=sflag, size = 0x4, scoped, tag = 'scoped memory for tpu_custom_call.1']
    #allocation5 [shape = 'u8[2048]{0}', space=vmem, size = 0x800, scoped, tag = 'input window, operand 1, single buffered']
    #allocation6 [shape = 's32[1]{0}', space=sflag, size = 0x4, scoped, tag = 'scoped memory for tpu_custom_call.1']
    #allocation7 [shape = 'u8[32768]{0}', space=vmem, size = 0x8000, scoped, tag = 'output window, operand 0, single buffered']
    %7 = vsyncpa [#allocation3], 0
    %8 = vsyncpa [#allocation6], 0
    %9 = vsyncpa [#allocation4], 0
    // Predicated region
    $region2: #{tpu_custom_call.1} parent=1 // pred_check
      _
    $region3: #{tpu_custom_call.1} parent=1 // pred_check_branch
      %11 = sbr.rel (0) target = $region5
    $region4: #{tpu_custom_call.1} parent=1 // pred_region
      %s13 = ssub.s32 256, 256
      %14 = vsyncadd [#allocation3], %s13
      %s15 = sshll.u32 [#allocation2], 4
      %s16 = int_to_ptr.vmem [resolvable:$true] %s15
      %21 = dma.hbm_to_vmem [thread:$0]  %s0, 256, %s16, [#allocation3], 128, 128, 8
    $region5: #{tpu_custom_call.1} parent=1 // pred_fallthru
      _
    // Predicated region
    $region6: #{tpu_custom_call.1} parent=1 // pred_check
      _
    $region7: #{tpu_custom_call.1} parent=1 // pred_check_branch
      %23 = sbr.rel (0) target = $region9
    $region8: #{tpu_custom_call.1} parent=1 // pred_region
      %s25 = ssub.s32 64, 64
      %26 = vsyncadd [#allocation6], %s25
      %s28 = sshll.u32 [#allocation5], 4
      %s29 = int_to_ptr.vmem [resolvable:$true] %s28
      %31 = dma.hbm_to_vmem [thread:$0]  %s1, 64, %s29, [#allocation6]
    $region9: #{tpu_custom_call.1} parent=1 // pred_fallthru
      _
    // Predicated region
    $region10: #{tpu_custom_call.1} parent=1 // pred_check
      _
    $region11: #{tpu_custom_call.1} parent=1 // pred_check_branch
      %33 = sbr.rel (0) target = $region13
    $region12: #{tpu_custom_call.1} parent=1 // pred_region
      %34 = dma.done [#allocation3], 256
    $region13: #{tpu_custom_call.1} parent=1 // pred_fallthru
      _
    // Predicated region
    $region14: #{tpu_custom_call.1} parent=1 // pred_check
      _
    $region15: #{tpu_custom_call.1} parent=1 // pred_check_branch
      %36 = sbr.rel (0) target = $region17
    $region16: #{tpu_custom_call.1} parent=1 // pred_region
      %37 = dma.done [#allocation6], 64
    $region17: #{tpu_custom_call.1} parent=1 // pred_fallthru
      _
    %v38 = vld [vmem:[#allocation2] sm:$0xff]
    %v39 = vld [vmem:[#allocation2 + $0x8] sm:$0xff]
    %v40 = vld [vmem:[#allocation5] sm:$0x1]
    %v42 = vlaneseq
    %v43 = vshrl.u32 %v42, 7
    %v44 = vsub.s32 0, %v43
    %v45 = vrot.slane %v40, %v44
    %v47 = vadd.f32 %v38, %v45
    %v48 = vadd.f32 %v39, %v45
    %49 = vst [vmem:[#allocation7] sm:$0xff] %v47
    %50 = vst [vmem:[#allocation7 + $0x20] sm:$0xff] %v48
    %v51 = vld [vmem:[#allocation5 + $0x1] sm:$0x1]
    %v53 = vlaneseq
    %v54 = vshrl.u32 %v53, 7
    %v55 = vsub.s32 0, %v54
    %v56 = vrot.slane %v51, %v55
    %v58 = vadd.f32 %v38, %v56
    %v59 = vadd.f32 %v39, %v56
    %60 = vst [vmem:[#allocation7 + $0x8] sm:$0xff] %v58
    %61 = vst [vmem:[#allocation7 + $0x28] sm:$0xff] %v59
    %v62 = vld [vmem:[#allocation5 + $0x2] sm:$0x1]
    %v64 = vlaneseq
    %v65 = vshrl.u32 %v64, 7
    %v66 = vsub.s32 0, %v65
    %v67 = vrot.slane %v62, %v66
    %v69 = vadd.f32 %v38, %v67
    %v70 = vadd.f32 %v39, %v67
    %71 = vst [vmem:[#allocation7 + $0x10] sm:$0xff] %v69
    %72 = vst [vmem:[#allocation7 + $0x30] sm:$0xff] %v70
    %v73 = vld [vmem:[#allocation5 + $0x3] sm:$0x1]
    %v75 = vlaneseq
    %v76 = vshrl.u32 %v75, 7
    %v77 = vsub.s32 0, %v76
    %v78 = vrot.slane %v73, %v77
    %v80 = vadd.f32 %v38, %v78
    %v81 = vadd.f32 %v39, %v78
    %82 = vst [vmem:[#allocation7 + $0x18] sm:$0xff] %v80
    %83 = vst [vmem:[#allocation7 + $0x38] sm:$0xff] %v81
    // Predicated region
    $region18: #{tpu_custom_call.1} parent=1 // pred_check
      _
    $region19: #{tpu_custom_call.1} parent=1 // pred_check_branch
      %85 = sbr.rel (0) target = $region21
    $region20: #{tpu_custom_call.1} parent=1 // pred_region
      %s87 = ssub.s32 1024, 1024
      %88 = vsyncadd [#allocation4], %s87
      %s89 = sshll.u32 [#allocation7], 4
      %s90 = int_to_ptr.vmem [resolvable:$true] %s89
      %95 = dma.vmem_to_hbm [thread:$0]  %s90, 1024, %s2, [#allocation4], 512, 512, 32
    $region21: #{tpu_custom_call.1} parent=1 // pred_fallthru
      _
    // Predicated region
    $region22: #{tpu_custom_call.1} parent=1 // pred_check
      _
    $region23: #{tpu_custom_call.1} parent=1 // pred_check_branch
      %97 = sbr.rel (0) target = $region25
    $region24: #{tpu_custom_call.1} parent=1 // pred_region
      %98 = dma.done [#allocation4], 1024
    $region25: #{tpu_custom_call.1} parent=1 // pred_fallthru
      _
    %99 = vsyncpa [#allocation3], 1
    %100 = vsyncpa [#allocation6], 1
    %101 = vsyncpa [#allocation4], 1

// kernel: tpu_custom_call.1
$region0: #{tpu_custom_call.1}
  #allocation0 [shape = 'u32[]', space=smem, size = 0x4, offset = 0x4, fixed_abs, tag = 'smem constant byte address 0x4 - core index']
  #allocation1 [shape = 'u32[144,128]{1,0:T(1,128)}', space=vmem, size = 0x12000, scoped, tag = 'internal scratch']
  %s0 = inlined_call_operand.hbm [shape: f32[16,128], index: 0, kind: input, shape index: {}]
  %s1 = inlined_call_operand.hbm [shape: f32[1,512], index: 1, kind: input, shape index: {}]
  %s2 = inlined_call_operand.hbm [shape: f32[16,512], index: 2, kind: output, shape index: {}]
  %s3 = sld [smem:[#allocation0]]
  $region26: #{tpu_custom_call.1} parent=0
    _
  %s5 = ssub.s32 1, %s3
  %s6 = scalar_select 0, %s5, %s3
  $region1: #{tpu_custom_call.1} parent=0
    #allocation2 [shape = 'u8[8192]{0}', space=vmem, size = 0x2000, scoped, tag = 'input window, operand 0, single buffered']
    #allocation3 [shape = 's32[1]{0}', space=sflag, size = 0x4, scoped, tag = 'scoped memory for tpu_custom_call.1']
    #allocation4 [shape = 's32[1]{0}', space=sflag, size = 0x4, scoped, tag = 'scoped memory for tpu_custom_call.1']
    #allocation5 [shape = 'u8[2048]{0}', space=vmem, size = 0x800, scoped, tag = 'input window, operand 1, single buffered']
    #allocation6 [shape = 's32[1]{0}', space=sflag, size = 0x4, scoped, tag = 'scoped memory for tpu_custom_call.1']
    #allocation7 [shape = 'u8[32768]{0}', space=vmem, size = 0x8000, scoped, tag = 'output window, operand 0, single buffered']
    %7 = vsyncpa [#allocation3], 0
    %8 = vsyncpa [#allocation6], 0
    %9 = vsyncpa [#allocation4], 0
    // Predicated region
    $region2: #{tpu_custom_call.1} parent=1 // pred_check
      _
    $region3: #{tpu_custom_call.1} parent=1 // pred_check_branch
      %11 = sbr.rel (0) target = $region5
    $region4: #{tpu_custom_call.1} parent=1 // pred_region
      %s13 = ssub.s32 256, 256
      %14 = vsyncadd [#allocation3], %s13
      %s15 = sshll.u32 [#allocation2], 4
      %s16 = int_to_ptr.vmem [resolvable:$true] %s15
      %21 = dma.hbm_to_vmem [thread:$0]  %s0, 256, %s16, [#allocation3], 128, 128, 8
    $region5: #{tpu_custom_call.1} parent=1 // pred_fallthru
      _
    // Predicated region
    $region6: #{tpu_custom_call.1} parent=1 // pred_check
      _
    $region7: #{tpu_custom_call.1} parent=1 // pred_check_branch
      %23 = sbr.rel (0) target = $region9
    $region8: #{tpu_custom_call.1} parent=1 // pred_region
      %s25 = ssub.s32 64, 64
      %26 = vsyncadd [#allocation6], %s25
      %s28 = sshll.u32 [#allocation5], 4
      %s29 = int_to_ptr.vmem [resolvable:$true] %s28
      %31 = dma.hbm_to_vmem [thread:$0]  %s1, 64, %s29, [#allocation6]
    $region9: #{tpu_custom_call.1} parent=1 // pred_fallthru
      _
    // Predicated region
    $region10: #{tpu_custom_call.1} parent=1 // pred_check
      _
    $region11: #{tpu_custom_call.1} parent=1 // pred_check_branch
      %33 = sbr.rel (0) target = $region13
    $region12: #{tpu_custom_call.1} parent=1 // pred_region
      %34 = dma.done [#allocation3], 256
    $region13: #{tpu_custom_call.1} parent=1 // pred_fallthru
      _
    // Predicated region
    $region14: #{tpu_custom_call.1} parent=1 // pred_check
      _
    $region15: #{tpu_custom_call.1} parent=1 // pred_check_branch
      %36 = sbr.rel (0) target = $region17
    $region16: #{tpu_custom_call.1} parent=1 // pred_region
      %37 = dma.done [#allocation6], 64
    $region17: #{tpu_custom_call.1} parent=1 // pred_fallthru
      _
    %v38 = vld [vmem:[#allocation2] sm:$0xff]
    %v39 = vld [vmem:[#allocation2 + $0x8] sm:$0xff]
    %v40 = vld [vmem:[#allocation5] sm:$0x1]
    %v42 = vlaneseq
    %v43 = vshrl.u32 %v42, 7
    %v44 = vsub.s32 0, %v43
    %v45 = vrot.slane %v40, %v44
    %v47 = vadd.f32 %v38, %v45
    %v48 = vadd.f32 %v39, %v45
    %49 = vst [vmem:[#allocation7] sm:$0xff] %v47
    %50 = vst [vmem:[#allocation7 + $0x20] sm:$0xff] %v48
    %v51 = vld [vmem:[#allocation5 + $0x1] sm:$0x1]
    %v53 = vlaneseq
    %v54 = vshrl.u32 %v53, 7
    %v55 = vsub.s32 0, %v54
    %v56 = vrot.slane %v51, %v55
    %v58 = vadd.f32 %v38, %v56
    %v59 = vadd.f32 %v39, %v56
    %60 = vst [vmem:[#allocation7 + $0x8] sm:$0xff] %v58
    %61 = vst [vmem:[#allocation7 + $0x28] sm:$0xff] %v59
    %v62 = vld [vmem:[#allocation5 + $0x2] sm:$0x1]
    %v64 = vlaneseq
    %v65 = vshrl.u32 %v64, 7
    %v66 = vsub.s32 0, %v65
    %v67 = vrot.slane %v62, %v66
    %v69 = vadd.f32 %v38, %v67
    %v70 = vadd.f32 %v39, %v67
    %71 = vst [vmem:[#allocation7 + $0x10] sm:$0xff] %v69
    %72 = vst [vmem:[#allocation7 + $0x30] sm:$0xff] %v70
    %v73 = vld [vmem:[#allocation5 + $0x3] sm:$0x1]
    %v75 = vlaneseq
    %v76 = vshrl.u32 %v75, 7
    %v77 = vsub.s32 0, %v76
    %v78 = vrot.slane %v73, %v77
    %v80 = vadd.f32 %v38, %v78
    %v81 = vadd.f32 %v39, %v78
    %82 = vst [vmem:[#allocation7 + $0x18] sm:$0xff] %v80
    %83 = vst [vmem:[#allocation7 + $0x38] sm:$0xff] %v81
    // Predicated region
    $region18: #{tpu_custom_call.1} parent=1 // pred_check
      _
    $region19: #{tpu_custom_call.1} parent=1 // pred_check_branch
      %85 = sbr.rel (0) target = $region21
    $region20: #{tpu_custom_call.1} parent=1 // pred_region
      %s87 = ssub.s32 1024, 1024
      %88 = vsyncadd [#allocation4], %s87
      %s89 = sshll.u32 [#allocation7], 4
      %s90 = int_to_ptr.vmem [resolvable:$true] %s89
      %95 = dma.vmem_to_hbm [thread:$0]  %s90, 1024, %s2, [#allocation4], 512, 512, 32
    $region21: #{tpu_custom_call.1} parent=1 // pred_fallthru
      _
    // Predicated region
    $region22: #{tpu_custom_call.1} parent=1 // pred_check
      _
    $region23: #{tpu_custom_call.1} parent=1 // pred_check_branch
      %97 = sbr.rel (0) target = $region25
    $region24: #{tpu_custom_call.1} parent=1 // pred_region
      %98 = dma.done [#allocation4], 1024
    $region25: #{tpu_custom_call.1} parent=1 // pred_fallthru
      _
    %99 = vsyncpa [#allocation3], 1
    %100 = vsyncpa [#allocation6], 1
    %101 = vsyncpa [#allocation4], 1

</llo_original>
